<compile_context>
chip_gen: v7x
topology: tpu7x:2x2x1
jax: 0.10.0
libtpu: 0.0.40
codegen_flags: <defaults>
</compile_context>

<pallas_src>
import functools

import jax
import jax.numpy as jnp
from jax.experimental import pallas as pl
from jax.experimental.pallas import tpu as pltpu


def _round_up(x, m):
    return ((x + m - 1) // m) * m


# ---------------------------------------------------------------------------
# Per-generation tiling / VMEM configuration.
# ---------------------------------------------------------------------------
_GEN_CONFIG = {
    #           token tile, MXU align, TCs/chip, VMEM budget,     VMEM hard cap
    "v5e":     dict(tm=256,  align=128, cores=1, budget=100 << 20, cap=120 << 20),
    "v6e":     dict(tm=1024, align=256, cores=1, budget=100 << 20, cap=120 << 20),
    "v7x":     dict(tm=512,  align=256, cores=2, budget=50 << 20,  cap=58 << 20),
    "unknown": dict(tm=256,  align=128, cores=1, budget=48 << 20,  cap=64 << 20),
}


def _tpu_generation():
    try:
        kind = jax.devices()[0].device_kind.lower()
    except Exception:
        return "unknown"
    if "v7" in kind:
        return "v7x"
    if "v6" in kind:
        return "v6e"
    if "v5" in kind:
        return "v5e"
    return "unknown"


def _vmem_budget(cfg):
    budget, cap = cfg["budget"], cfg["cap"]
    try:
        phys = int(pltpu.get_tpu_info().vmem_capacity_bytes)
        if phys > 0:
            budget = min(budget, int(phys * 0.8))
            cap = min(cap, int(phys * 0.92))
    except Exception:
        pass
    return budget, cap


def _streaming_vmem_bytes(tm, tk, dim, xbytes, wbytes, obytes):
    """Per-call VMEM working set of the streamed-reduction kernel."""
    return (2 * tm * dim * xbytes          # x tile (double-buffered)
            + 2 * dim * 2 * tk * wbytes    # w13 tile
            + 2 * 2 * tk * 4               # b13 tile
            + 2 * tk * dim * wbytes        # w2 tile
            + 2 * dim * 4                  # b2
            + 2 * tm * dim * obytes        # out tile
            + tm * dim * 4)                # f32 accumulator scratch


def _resident_vmem_bytes(tm, dim, inner, xbytes, wbytes, obytes):
    """Per-call VMEM working set of the weights-resident kernel."""
    return (2 * tm * dim * xbytes
            + 2 * dim * 2 * inner * wbytes
            + 2 * 2 * inner * 4
            + 2 * inner * dim * wbytes
            + 2 * dim * 4
            + 2 * tm * dim * obytes
            + tm * dim * 4)


# ---------------------------------------------------------------------------
# Kernels.
# ---------------------------------------------------------------------------
def _expert_streaming_kernel(x_ref, w13_ref, b13_ref, w2_ref, b2_ref, o_ref,
                             acc_ref):
    """grid = (token tiles, inner tiles); inner axis is a streamed reduction."""
    k = pl.program_id(1)
    nk = pl.num_programs(1)
    tk = w2_ref.shape[0]

    @pl.when(k == 0)
    def _init():
        acc_ref[...] = jnp.zeros_like(acc_ref)

    # x block index is constant over k -> DMA'd once per token tile; the bf16
    # cast happens in-kernel so the wrapper never re-writes the activations.
    x = x_ref[...].astype(w13_ref.dtype)
    # Fused up-projection: one MXU matmul produces both w1 and w3 branches.
    h13 = jnp.dot(x, w13_ref[...], preferred_element_type=jnp.float32)
    h13 = h13 + b13_ref[...]                  # [tm, 2*tk] f32
    h1 = h13[:, :tk]                          # w1 branch
    h3 = h13[:, tk:]                          # w3 branch
    # SiLU with the divide on the EUP slot (free next to MXU work).
    gate = h3 * pl.reciprocal(1.0 + jnp.exp(-h3), approx=True)
    h = (gate * h1).astype(w2_ref.dtype)      # bf16 operand for the MXU
    acc_ref[...] += jnp.dot(h, w2_ref[...], preferred_element_type=jnp.float32)

    @pl.when(k == nk - 1)
    def _finish():
        # Single bias add + cast + HBM writeback per output tile.
        o_ref[...] = (acc_ref[...] + b2_ref[...]).astype(o_ref.dtype)


def _expert_resident_kernel(tk, nk, x_ref, w13_ref, b13_ref, w2_ref, b2_ref,
                            o_ref, acc_ref):
    """Weights fully resident in VMEM; grid runs only over token tiles."""
    x = x_ref[...].astype(w13_ref.dtype)
    acc_ref[...] = jnp.zeros_like(acc_ref)
    for k in range(nk):                       # static unroll (nk kept small)
        w13_k = w13_ref[:, 2 * k * tk:(2 * k + 2) * tk]
        b13_k = b13_ref[:, 2 * k * tk:(2 * k + 2) * tk]
        h13 = jnp.dot(x, w13_k, preferred_element_type=jnp.float32) + b13_k
        h1 = h13[:, :tk]
        h3 = h13[:, tk:]
        gate = h3 * pl.reciprocal(1.0 + jnp.exp(-h3), approx=True)
        h = (gate * h1).astype(w2_ref.dtype)
        acc_ref[...] += jnp.dot(h, w2_ref[k * tk:(k + 1) * tk, :],
                                preferred_element_type=jnp.float32)
    o_ref[...] = (acc_ref[...] + b2_ref[...]).astype(o_ref.dtype)


# ---------------------------------------------------------------------------
# Wrapper.
# ---------------------------------------------------------------------------
def expert_forward(x, packed_params, *, tm=None, force_streaming=False,
                   vmem_limit_bytes=None):
    """x: [..., dim] -> [..., dim], matching PyTorch Expert.forward.

    packed_params: output of pack_expert_params (tk travels with the params).
    tm: optional token-tile override; default is a per-generation choice.
    """
    w13, b13, w2, b2, tk = packed_params
    inner, dim = w2.shape
    assert w13.shape == (dim, 2 * inner), "packed w13 has unexpected shape"
    assert inner % tk == 0, "packed tk must divide inner_dim"
    nk = inner // tk

    gen = _tpu_generation()
    cfg = _GEN_CONFIG[gen]
    align = cfg["align"]
    budget, cap = _vmem_budget(cfg)

    orig_shape = x.shape
    x2d = x.reshape(-1, dim)
    m = x2d.shape[0]

    xbytes = jnp.dtype(x.dtype).itemsize
    wbytes = jnp.dtype(w13.dtype).itemsize
    obytes = xbytes

    # Roofline-driven token tile, shrunk for small M (decode), then split so
    # both v7x TensorCores get work when a single oversized tile would remain.
    tm = cfg["tm"] if tm is None else tm
    tm = max(align, _round_up(min(tm, _round_up(m, align)), align))
    if cfg["cores"] > 1 and m > align and pl.cdiv(m, tm) == 1:
        tm = max(align, _round_up(pl.cdiv(m, cfg["cores"]), align))

    headroom = 1.2
    use_resident = False
    need = None
    if not force_streaming and nk <= 8:
        need = _resident_vmem_bytes(tm, dim, inner, xbytes, wbytes, obytes)
        use_resident = need * headroom + (1 << 20) <= budget
    if not use_resident:
        while True:
            need = _streaming_vmem_bytes(tm, tk, dim, xbytes, wbytes, obytes)
            if need * headroom + (1 << 20) <= budget or tm <= align:
                break
            tm = max(align, _round_up(tm // 2, align))

    if vmem_limit_bytes is None:
        vmem_limit_bytes = int(min(cap, max(32 << 20,
                                            need * headroom + (2 << 20))))

    m_pad = _round_up(m, tm)
    if m_pad != m:
        x2d = jnp.pad(x2d, ((0, m_pad - m), (0, 0)))

    if use_resident:
        out = pl.pallas_call(
            functools.partial(_expert_resident_kernel, tk, nk),
            out_shape=jax.ShapeDtypeStruct((m_pad, dim), x.dtype),
            grid_spec=pltpu.PrefetchScalarGridSpec(
                num_scalar_prefetch=0,
                grid=(m_pad // tm,),
                in_specs=[
                    pl.BlockSpec((tm, dim), lambda i: (i, 0)),         # x tile
                    pl.BlockSpec((dim, 2 * inner), lambda i: (0, 0)),  # w13
                    pl.BlockSpec((1, 2 * inner), lambda i: (0, 0)),    # b13
                    pl.BlockSpec((inner, dim), lambda i: (0, 0)),      # w2
                    pl.BlockSpec((1, dim), lambda i: (0, 0)),          # b2
                ],
                out_specs=pl.BlockSpec((tm, dim), lambda i: (i, 0)),
                scratch_shapes=[pltpu.VMEM((tm, dim), jnp.float32)],
            ),
            compiler_params=pltpu.CompilerParams(
                dimension_semantics=("parallel",),
                vmem_limit_bytes=vmem_limit_bytes,
            ),
        )(x2d, w13, b13, w2, b2)
    else:
        out = pl.pallas_call(
            _expert_streaming_kernel,
            out_shape=jax.ShapeDtypeStruct((m_pad, dim), x.dtype),
            grid_spec=pltpu.PrefetchScalarGridSpec(
                num_scalar_prefetch=0,
                grid=(m_pad // tm, nk),
                in_specs=[
                    pl.BlockSpec((tm, dim), lambda i, k: (i, 0)),       # x tile
                    pl.BlockSpec((dim, 2 * tk), lambda i, k: (0, k)),   # w13_k
                    pl.BlockSpec((1, 2 * tk), lambda i, k: (0, k)),     # b13_k
                    pl.BlockSpec((tk, dim), lambda i, k: (k, 0)),       # w2_k
                    pl.BlockSpec((1, dim), lambda i, k: (0, 0)),        # b2
                ],
                out_specs=pl.BlockSpec((tm, dim), lambda i, k: (i, 0)),
                scratch_shapes=[pltpu.VMEM((tm, dim), jnp.float32)],
            ),
            compiler_params=pltpu.CompilerParams(
                dimension_semantics=("parallel", "arbitrary"),
                vmem_limit_bytes=vmem_limit_bytes,
            ),
        )(x2d, w13, b13, w2, b2)

    if m_pad != m:
        out = out[:m]
    return out.reshape(orig_shape)


# ---------------------------------------------------------------------------
# Parameter helpers (mirror the PyTorch module) + pure-JAX reference.
# ---------------------------------------------------------------------------
def init_expert_params(key, dim, inner_dim, dtype=jnp.float32):
    """Mirror nn.Linear's U(-1/sqrt(fan_in), 1/sqrt(fan_in)) init.
    Weights are stored transposed ([in, out]) for the kernel."""
    ks = jax.random.split(key, 6)

    def lin(kw, kb, fan_in, fan_out):
        bound = 1.0 / (fan_in ** 0.5)
        w = jax.random.uniform(kw, (fan_in, fan_out), dtype, -bound, bound)
        b = jax.random.uniform(kb, (1, fan_out), dtype, -bound, bound)
        return w, b

    w1, b1 = lin(ks[0], ks[1], dim, inner_dim)
    w2, b2 = lin(ks[2], ks[3], inner_dim, dim)
    w3, b3 = lin(ks[4], ks[5], dim, inner_dim)
    return (w1, b1, w3, b3, w2, b2)


def pack_expert_params(params, tk=512, weight_dtype=jnp.bfloat16):
    """Fuse w1/w3 into a per-inner-tile interleaved [dim, 2*inner] matrix so
    each inner tile k holds [w1_k | w3_k].  Weights stored bf16 for the MXU;
    biases kept f32 for the f32 epilogue.  tk is returned with the params so
    the kernel always slices with the layout it was packed for."""
    w1, b1, w3, b3, w2, b2 = params
    dim, inner = w1.shape
    tk = min(tk, inner)
    assert inner % tk == 0, "inner_dim must be divisible by tk"
    assert tk == inner or tk % 128 == 0, "tk must be a multiple of 128"
    nk = inner // tk

    def interleave(a, b):
        r = a.shape[0]
        return jnp.concatenate(
            [a.reshape(r, nk, 1, tk), b.reshape(r, nk, 1, tk)], axis=2
        ).reshape(r, 2 * inner)

    w13 = interleave(w1, w3).astype(weight_dtype)
    b13 = interleave(b1, b3).astype(jnp.float32)
    return (w13, b13, w2.astype(weight_dtype), b2.astype(jnp.float32), tk)


def expert_reference(x, params, weight_dtype=jnp.bfloat16):
    """Plain-JAX reference identical to the PyTorch forward, applying the same
    bf16 operand rounding the kernel uses (f32 accumulation)."""
    w1, b1, w3, b3, w2, b2 = params
    f32 = jnp.float32
    q = lambda a: a.astype(weight_dtype).astype(f32)
    xq = q(x)
    h1 = jnp.dot(xq, q(w1), precision="highest") + b1
    h3 = jnp.dot(xq, q(w3), precision="highest") + b3
    h = q(jax.nn.silu(h3) * h1)
    return jnp.dot(h, q(w2), precision="highest") + b2


if __name__ == "__main__":
    # Small demo shapes (exercise padding, small-M tiling and both kernel paths).
    dim, inner_dim = 128, 256
    batch, seq = 2, 8

    key = jax.random.PRNGKey(0)
    kx, kp = jax.random.split(key)
    x = jax.random.normal(kx, (batch, seq, dim), dtype=jnp.float32)

    params = init_expert_params(kp, dim, inner_dim)
    packed = pack_expert_params(params, tk=128)   # at scale: tk=512

    ref = expert_reference(x.reshape(-1, dim), params).reshape(x.shape)

    # Auto path: this expert is small, so the weights-resident kernel is used.
    out_resident = expert_forward(x, packed)
    jax.block_until_ready(out_resident)

    # Also exercise the streamed-reduction kernel (the large-expert path).
    out_streaming = expert_forward(x, packed, force_streaming=True)
    jax.block_until_ready(out_streaming)

    for name, out in (("resident", out_resident), ("streaming", out_streaming)):
        assert out.shape == x.shape
        max_err = float(jnp.max(jnp.abs(out - ref)))
        assert jnp.allclose(out, ref, atol=5e-3, rtol=5e-3), (
            f"{name} path mismatch vs reference (max abs err {max_err})")
    print("KERNEL_OK")
</pallas_src>

<mosaic_0001>
module attributes {stable_mosaic.version = 11 : i64} {
  func.func @_expert_resident_kernel(%arg0: i32, %arg1: memref<128x128xf32, #tpu.memory_space<vmem>>, %arg2: memref<128x512xbf16, #tpu.memory_space<vmem>>, %arg3: memref<1x512xf32, #tpu.memory_space<vmem>>, %arg4: memref<256x128xbf16, #tpu.memory_space<vmem>>, %arg5: memref<1x128xf32, #tpu.memory_space<vmem>>, %arg6: memref<128x128xf32, #tpu.memory_space<vmem>>, %arg7: memref<128x128xf32, #tpu.memory_space<vmem>>) attributes {dimension_semantics = [#tpu.dimension_semantics<parallel>], iteration_bounds = array<i64: 1>, scalar_prefetch = 0 : i64, scratch_operands = 1 : i64, tpu.core_type = #tpu.core_type<tc>, window_params = [{transform_indices = @transform_0, window_bounds = array<i64: 128, 128>}, {pipeline_mode = #tpu.pipeline_mode<synchronous>, transform_indices = @transform_1, window_bounds = array<i64: 128, 512>}, {pipeline_mode = #tpu.pipeline_mode<synchronous>, transform_indices = @transform_2, window_bounds = array<i64: 1, 512>}, {pipeline_mode = #tpu.pipeline_mode<synchronous>, transform_indices = @transform_3, window_bounds = array<i64: 256, 128>}, {pipeline_mode = #tpu.pipeline_mode<synchronous>, transform_indices = @transform_4, window_bounds = array<i64: 1, 128>}, {transform_indices = @transform_5, window_bounds = array<i64: 128, 128>}]} {
    %c0 = arith.constant 0 : index
    %c0_0 = arith.constant 0 : index
    %0 = vector.load %arg1[%c0, %c0_0] : memref<128x128xf32, #tpu.memory_space<vmem>>, vector<128x128xf32>
    %1 = arith.truncf %0 : vector<128x128xf32> to vector<128x128xbf16>
    %cst = arith.constant 0.000000e+00 : f32
    %2 = vector.broadcast %cst : f32 to vector<128x128xf32>
    %c0_1 = arith.constant 0 : index
    %c0_2 = arith.constant 0 : index
    %3 = vector.load %arg7[%c0_1, %c0_2] : memref<128x128xf32, #tpu.memory_space<vmem>>, vector<128x128xf32>
    tpu.vector_store %arg7[%c0_1, %c0_2], %2 {strides = array<i32>} : memref<128x128xf32, #tpu.memory_space<vmem>>, vector<128x128xf32>,
    %c0_3 = arith.constant 0 : index
    %c0_4 = arith.constant 0 : index
    %4 = vector.load %arg2[%c0_3, %c0_4] : memref<128x512xbf16, #tpu.memory_space<vmem>>, vector<128x256xbf16>
    %c0_5 = arith.constant 0 : index
    %c0_6 = arith.constant 0 : index
    %5 = vector.load %arg3[%c0_5, %c0_6] : memref<1x512xf32, #tpu.memory_space<vmem>>, vector<1x256xf32>
    %cst_7 = arith.constant dense<0.000000e+00> : vector<128x256xf32>
    %6 = tpu.matmul %1, %4, %cst_7 {dimension_numbers = #tpu.dot_dimension_numbers<[1], [0], [0], [1], [0, 0, 1, 1], [], []>} : vector<128x128xbf16>, vector<128x256xbf16>, vector<128x256xf32> -> vector<128x256xf32>
    %7 = vector.broadcast %5 : vector<1x256xf32> to vector<128x256xf32>
    %8 = arith.addf %6, %7 : vector<128x256xf32>
    %9 = vector.extract_strided_slice %8 {offsets = [0, 0], sizes = [128, 128], strides = [1, 1]} : vector<128x256xf32> to vector<128x128xf32>
    %10 = vector.extract_strided_slice %8 {offsets = [0, 128], sizes = [128, 128], strides = [1, 1]} : vector<128x256xf32> to vector<128x128xf32>
    %cst_8 = arith.constant 0.000000e+00 : f32
    %11 = vector.broadcast %cst_8 : f32 to vector<128x128xf32>
    %12 = arith.subf %11, %10 : vector<128x128xf32>
    %13 = math.exp %12 : vector<128x128xf32>
    %cst_9 = arith.constant 1.000000e+00 : f32
    %14 = vector.broadcast %cst_9 : f32 to vector<128x128xf32>
    %15 = arith.addf %14, %13 : vector<128x128xf32>
    %16 = tpu.reciprocal %15 {approx = true} : vector<128x128xf32> -> vector<128x128xf32>
    %17 = arith.mulf %10, %16 : vector<128x128xf32>
    %18 = arith.mulf %17, %9 : vector<128x128xf32>
    %19 = arith.truncf %18 : vector<128x128xf32> to vector<128x128xbf16>
    %c0_10 = arith.constant 0 : index
    %c0_11 = arith.constant 0 : index
    %20 = vector.load %arg7[%c0_10, %c0_11] : memref<128x128xf32, #tpu.memory_space<vmem>>, vector<128x128xf32>
    %c0_12 = arith.constant 0 : index
    %c0_13 = arith.constant 0 : index
    %21 = vector.load %arg4[%c0_12, %c0_13] : memref<256x128xbf16, #tpu.memory_space<vmem>>, vector<128x128xbf16>
    %cst_14 = arith.constant dense<0.000000e+00> : vector<128x128xf32>
    %22 = tpu.matmul %19, %21, %cst_14 {dimension_numbers = #tpu.dot_dimension_numbers<[1], [0], [0], [1], [0, 0, 1, 1], [], []>} : vector<128x128xbf16>, vector<128x128xbf16>, vector<128x128xf32> -> vector<128x128xf32>
    %23 = arith.addf %20, %22 : vector<128x128xf32>
    %c0_15 = arith.constant 0 : index
    %c0_16 = arith.constant 0 : index
    %24 = vector.load %arg7[%c0_15, %c0_16] : memref<128x128xf32, #tpu.memory_space<vmem>>, vector<128x128xf32>
    tpu.vector_store %arg7[%c0_15, %c0_16], %23 {strides = array<i32>} : memref<128x128xf32, #tpu.memory_space<vmem>>, vector<128x128xf32>,
    %c0_17 = arith.constant 0 : index
    %c256 = arith.constant 256 : index
    %25 = vector.load %arg2[%c0_17, %c256] : memref<128x512xbf16, #tpu.memory_space<vmem>>, vector<128x256xbf16>
    %c0_18 = arith.constant 0 : index
    %c256_19 = arith.constant 256 : index
    %26 = vector.load %arg3[%c0_18, %c256_19] : memref<1x512xf32, #tpu.memory_space<vmem>>, vector<1x256xf32>
    %cst_20 = arith.constant dense<0.000000e+00> : vector<128x256xf32>
    %27 = tpu.matmul %1, %25, %cst_20 {dimension_numbers = #tpu.dot_dimension_numbers<[1], [0], [0], [1], [0, 0, 1, 1], [], []>} : vector<128x128xbf16>, vector<128x256xbf16>, vector<128x256xf32> -> vector<128x256xf32>
    %28 = vector.broadcast %26 : vector<1x256xf32> to vector<128x256xf32>
    %29 = arith.addf %27, %28 : vector<128x256xf32>
    %30 = vector.extract_strided_slice %29 {offsets = [0, 0], sizes = [128, 128], strides = [1, 1]} : vector<128x256xf32> to vector<128x128xf32>
    %31 = vector.extract_strided_slice %29 {offsets = [0, 128], sizes = [128, 128], strides = [1, 1]} : vector<128x256xf32> to vector<128x128xf32>
    %cst_21 = arith.constant 0.000000e+00 : f32
    %32 = vector.broadcast %cst_21 : f32 to vector<128x128xf32>
    %33 = arith.subf %32, %31 : vector<128x128xf32>
    %34 = math.exp %33 : vector<128x128xf32>
    %cst_22 = arith.constant 1.000000e+00 : f32
    %35 = vector.broadcast %cst_22 : f32 to vector<128x128xf32>
    %36 = arith.addf %35, %34 : vector<128x128xf32>
    %37 = tpu.reciprocal %36 {approx = true} : vector<128x128xf32> -> vector<128x128xf32>
    %38 = arith.mulf %31, %37 : vector<128x128xf32>
    %39 = arith.mulf %38, %30 : vector<128x128xf32>
    %40 = arith.truncf %39 : vector<128x128xf32> to vector<128x128xbf16>
    %c0_23 = arith.constant 0 : index
    %c0_24 = arith.constant 0 : index
    %41 = vector.load %arg7[%c0_23, %c0_24] : memref<128x128xf32, #tpu.memory_space<vmem>>, vector<128x128xf32>
    %c128 = arith.constant 128 : index
    %c0_25 = arith.constant 0 : index
    %42 = vector.load %arg4[%c128, %c0_25] : memref<256x128xbf16, #tpu.memory_space<vmem>>, vector<128x128xbf16>
    %cst_26 = arith.constant dense<0.000000e+00> : vector<128x128xf32>
    %43 = tpu.matmul %40, %42, %cst_26 {dimension_numbers = #tpu.dot_dimension_numbers<[1], [0], [0], [1], [0, 0, 1, 1], [], []>} : vector<128x128xbf16>, vector<128x128xbf16>, vector<128x128xf32> -> vector<128x128xf32>
    %44 = arith.addf %41, %43 : vector<128x128xf32>
    %c0_27 = arith.constant 0 : index
    %c0_28 = arith.constant 0 : index
    %45 = vector.load %arg7[%c0_27, %c0_28] : memref<128x128xf32, #tpu.memory_space<vmem>>, vector<128x128xf32>
    tpu.vector_store %arg7[%c0_27, %c0_28], %44 {strides = array<i32>} : memref<128x128xf32, #tpu.memory_space<vmem>>, vector<128x128xf32>,
    %c0_29 = arith.constant 0 : index
    %c0_30 = arith.constant 0 : index
    %46 = vector.load %arg7[%c0_29, %c0_30] : memref<128x128xf32, #tpu.memory_space<vmem>>, vector<128x128xf32>
    %c0_31 = arith.constant 0 : index
    %c0_32 = arith.constant 0 : index
    %47 = vector.load %arg5[%c0_31, %c0_32] : memref<1x128xf32, #tpu.memory_space<vmem>>, vector<1x128xf32>
    %48 = vector.broadcast %47 : vector<1x128xf32> to vector<128x128xf32>
    %49 = arith.addf %46, %48 : vector<128x128xf32>
    %c0_33 = arith.constant 0 : index
    %c0_34 = arith.constant 0 : index
    %50 = vector.load %arg6[%c0_33, %c0_34] : memref<128x128xf32, #tpu.memory_space<vmem>>, vector<128x128xf32>
    tpu.vector_store %arg6[%c0_33, %c0_34], %49 {strides = array<i32>} : memref<128x128xf32, #tpu.memory_space<vmem>>, vector<128x128xf32>,
    return
  }
  func.func @transform_0(%arg0: i32) -> (i32, i32) {
    %c0_i32 = arith.constant 0 : i32
    %c0_i32_0 = arith.constant 0 : i32
    return %arg0, %c0_i32 : i32, i32
  }
  func.func @transform_1(%arg0: i32) -> (i32, i32) {
    %c0_i32 = arith.constant 0 : i32
    %c0_i32_0 = arith.constant 0 : i32
    %c0_i32_1 = arith.constant 0 : i32
    return %c0_i32, %c0_i32_0 : i32, i32
  }
  func.func @transform_2(%arg0: i32) -> (i32, i32) {
    %c0_i32 = arith.constant 0 : i32
    %c0_i32_0 = arith.constant 0 : i32
    %c0_i32_1 = arith.constant 0 : i32
    return %c0_i32, %c0_i32_0 : i32, i32
  }
  func.func @transform_3(%arg0: i32) -> (i32, i32) {
    %c0_i32 = arith.constant 0 : i32
    %c0_i32_0 = arith.constant 0 : i32
    %c0_i32_1 = arith.constant 0 : i32
    return %c0_i32, %c0_i32_0 : i32, i32
  }
  func.func @transform_4(%arg0: i32) -> (i32, i32) {
    %c0_i32 = arith.constant 0 : i32
    %c0_i32_0 = arith.constant 0 : i32
    %c0_i32_1 = arith.constant 0 : i32
    return %c0_i32, %c0_i32_0 : i32, i32
  }
  func.func @transform_5(%arg0: i32) -> (i32, i32) {
    %c0_i32 = arith.constant 0 : i32
    %c0_i32_0 = arith.constant 0 : i32
    return %arg0, %c0_i32 : i32, i32
  }
}

</mosaic_0001>

<llo_original>
// kernel: tpu_custom_call.1
$region0: #{tpu_custom_call.1}
  #allocation0 [shape = 'u32[]', space=smem, size = 0x4, offset = 0x4, fixed_abs, tag = 'smem constant byte address 0x4 - core index']
  #allocation1 [shape = 'u32[144,128]{1,0:T(1,128)}', space=vmem, size = 0x12000, scoped, tag = 'internal scratch']
  #allocation2 [shape = 'f32[128,128]{1,0:T(8,128)}', space=vmem, size = 0x10000, scoped, tag = 'scratch operand']
  %s0 = inlined_call_operand.hbm [shape: f32[128,128], index: 0, kind: input, shape index: {}]
  %s1 = inlined_call_operand.hbm [shape: bf16[128,512], index: 1, kind: input, shape index: {}]
  %s2 = inlined_call_operand.vmem [shape: f32[1,512], index: 2, kind: input, shape index: {}]
  %s3 = inlined_call_operand.hbm [shape: bf16[256,128], index: 3, kind: input, shape index: {}]
  %s4 = inlined_call_operand.vmem [shape: f32[1,128], index: 4, kind: input, shape index: {}]
  %s5 = inlined_call_operand.hbm [shape: f32[128,128], index: 5, kind: output, shape index: {}]
  %s6 = sld [smem:[#allocation0]]
  $region42: #{tpu_custom_call.1} parent=0
    _
  %s8 = ssub.s32 1, %s6
  %s9 = scalar_select 0, %s8, %s6
  $region1: #{tpu_custom_call.1} parent=0
    #allocation3 [shape = 'u8[65536]{0}', space=vmem, size = 0x10000, scoped, tag = 'input window, operand 0, single buffered']
    #allocation4 [shape = 's32[1]{0}', space=sflag, size = 0x4, scoped, tag = 'scoped memory for tpu_custom_call.1']
    #allocation5 [shape = 's32[1]{0}', space=sflag, size = 0x4, scoped, tag = 'scoped memory for tpu_custom_call.1']
    #allocation6 [shape = 'u8[131072]{0}', space=vmem, size = 0x20000, scoped, tag = 'input window, operand 1, single buffered']
    #allocation7 [shape = 's32[1]{0}', space=sflag, size = 0x4, scoped, tag = 'scoped memory for tpu_custom_call.1']
    #allocation8 [shape = 'u8[65536]{0}', space=vmem, size = 0x10000, scoped, tag = 'input window, operand 3, single buffered']
    #allocation9 [shape = 'u8[65536]{0}', space=vmem, size = 0x10000, scoped, tag = 'output window, operand 0, single buffered']
    %10 = vsyncpa [#allocation4], 0
    %11 = vsyncpa [#allocation7], 0
    %12 = vsyncpa [#allocation5], 0
    // Predicated region
    $region2: #{tpu_custom_call.1} parent=1 // pred_check
      _
    $region3: #{tpu_custom_call.1} parent=1 // pred_check_branch
      %14 = sbr.rel (0) target = $region5
    $region4: #{tpu_custom_call.1} parent=1 // pred_region
      %s16 = ssub.s32 2048, 2048
      %17 = vsyncadd [#allocation4], %s16
      %s18 = sshll.u32 [#allocation3], 4
      %s19 = int_to_ptr.vmem [resolvable:$true] %s18
      %24 = dma.hbm_to_vmem [thread:$0]  %s0, 2048, %s19, [#allocation4], 128, 128, 8
    $region5: #{tpu_custom_call.1} parent=1 // pred_fallthru
      _
    // Predicated region
    $region6: #{tpu_custom_call.1} parent=1 // pred_check
      _
    $region7: #{tpu_custom_call.1} parent=1 // pred_check_branch
      %26 = sbr.rel (0) target = $region9
    $region8: #{tpu_custom_call.1} parent=1 // pred_region
      %s28 = ssub.s32 4096, 4096
      %29 = vsyncadd [#allocation7], %s28
      %s30 = sshll.u32 [#allocation6], 4
      %s31 = int_to_ptr.vmem [resolvable:$true] %s30
      %36 = dma.hbm_to_vmem [thread:$0]  %s1, 4096, %s31, [#allocation7], 256, 256, 16
    $region9: #{tpu_custom_call.1} parent=1 // pred_fallthru
      _
    // Predicated region
    $region10: #{tpu_custom_call.1} parent=1 // pred_check
      _
    $region11: #{tpu_custom_call.1} parent=1 // pred_check_branch
      %38 = sbr.rel (0) target = $region13
    $region12: #{tpu_custom_call.1} parent=1 // pred_region
      _
    $region13: #{tpu_custom_call.1} parent=1 // pred_fallthru
      _
    // Predicated region
    $region14: #{tpu_custom_call.1} parent=1 // pred_check
      _
    $region15: #{tpu_custom_call.1} parent=1 // pred_check_branch
      %40 = sbr.rel (0) target = $region17
    $region16: #{tpu_custom_call.1} parent=1 // pred_region
      %s42 = ssub.s32 2048, 2048
      %43 = vsyncadd [#allocation7], %s42
      %s44 = sshll.u32 [#allocation8], 4
      %s45 = int_to_ptr.vmem [resolvable:$true] %s44
      %50 = dma.hbm_to_vmem [thread:$0]  %s3, 2048, %s45, [#allocation7], 64, 64, 4
    $region17: #{tpu_custom_call.1} parent=1 // pred_fallthru
      _
    // Predicated region
    $region18: #{tpu_custom_call.1} parent=1 // pred_check
      _
    $region19: #{tpu_custom_call.1} parent=1 // pred_check_branch
      %52 = sbr.rel (0) target = $region21
    $region20: #{tpu_custom_call.1} parent=1 // pred_region
      _
    $region21: #{tpu_custom_call.1} parent=1 // pred_fallthru
      _
    // Predicated region
    $region22: #{tpu_custom_call.1} parent=1 // pred_check
      _
    $region23: #{tpu_custom_call.1} parent=1 // pred_check_branch
      %54 = sbr.rel (0) target = $region25
    $region24: #{tpu_custom_call.1} parent=1 // pred_region
      %55 = dma.done [#allocation4], 2048
    $region25: #{tpu_custom_call.1} parent=1 // pred_fallthru
      _
    // Predicated region
    $region26: #{tpu_custom_call.1} parent=1 // pred_check
      _
    $region27: #{tpu_custom_call.1} parent=1 // pred_check_branch
      %57 = sbr.rel (0) target = $region29
    $region28: #{tpu_custom_call.1} parent=1 // pred_region
      %58 = dma.done [#allocation7], 4096
    $region29: #{tpu_custom_call.1} parent=1 // pred_fallthru
      _
    // Predicated region
    $region30: #{tpu_custom_call.1} parent=1 // pred_check
      _
    $region31: #{tpu_custom_call.1} parent=1 // pred_check_branch
      %60 = sbr.rel (0) target = $region33
    $region32: #{tpu_custom_call.1} parent=1 // pred_region
      %61 = dma.done [#allocation7], 2048
    $region33: #{tpu_custom_call.1} parent=1 // pred_fallthru
      _
    %v63 = vld [vmem:[#allocation3] sm:$0xff]
    %v64 = vld [vmem:[#allocation3 + $0x8] sm:$0xff]
    %v65 = vld [vmem:[#allocation3 + $0x10] sm:$0xff]
    %v66 = vld [vmem:[#allocation3 + $0x18] sm:$0xff]
    %v67 = vld [vmem:[#allocation3 + $0x20] sm:$0xff]
    %v68 = vld [vmem:[#allocation3 + $0x28] sm:$0xff]
    %v69 = vld [vmem:[#allocation3 + $0x30] sm:$0xff]
    %v70 = vld [vmem:[#allocation3 + $0x38] sm:$0xff]
    %v71 = vld [vmem:[#allocation3 + $0x40] sm:$0xff]
    %v72 = vld [vmem:[#allocation3 + $0x48] sm:$0xff]
    %v73 = vld [vmem:[#allocation3 + $0x50] sm:$0xff]
    %v74 = vld [vmem:[#allocation3 + $0x58] sm:$0xff]
    %v75 = vld [vmem:[#allocation3 + $0x60] sm:$0xff]
    %v76 = vld [vmem:[#allocation3 + $0x68] sm:$0xff]
    %v77 = vld [vmem:[#allocation3 + $0x70] sm:$0xff]
    %v78 = vld [vmem:[#allocation3 + $0x78] sm:$0xff]
    %v79 = vpack.c.bf16 %v64, %v63
    %v80 = vpack.c.bf16 %v66, %v65
    %v81 = vpack.c.bf16 %v68, %v67
    %v82 = vpack.c.bf16 %v70, %v69
    %v83 = vpack.c.bf16 %v72, %v71
    %v84 = vpack.c.bf16 %v74, %v73
    %v85 = vpack.c.bf16 %v76, %v75
    %v86 = vpack.c.bf16 %v78, %v77
    %87 = vst [vmem:[#allocation2] sm:$0xff] 0.0
    %88 = vst [vmem:[#allocation2 + $0x8] sm:$0xff] 0.0
    %89 = vst [vmem:[#allocation2 + $0x10] sm:$0xff] 0.0
    %90 = vst [vmem:[#allocation2 + $0x18] sm:$0xff] 0.0
    %91 = vst [vmem:[#allocation2 + $0x20] sm:$0xff] 0.0
    %92 = vst [vmem:[#allocation2 + $0x28] sm:$0xff] 0.0
    %93 = vst [vmem:[#allocation2 + $0x30] sm:$0xff] 0.0
    %94 = vst [vmem:[#allocation2 + $0x38] sm:$0xff] 0.0
    %95 = vst [vmem:[#allocation2 + $0x40] sm:$0xff] 0.0
    %96 = vst [vmem:[#allocation2 + $0x48] sm:$0xff] 0.0
    %97 = vst [vmem:[#allocation2 + $0x50] sm:$0xff] 0.0
    %98 = vst [vmem:[#allocation2 + $0x58] sm:$0xff] 0.0
    %99 = vst [vmem:[#allocation2 + $0x60] sm:$0xff] 0.0
    %100 = vst [vmem:[#allocation2 + $0x68] sm:$0xff] 0.0
    %101 = vst [vmem:[#allocation2 + $0x70] sm:$0xff] 0.0
    %102 = vst [vmem:[#allocation2 + $0x78] sm:$0xff] 0.0
    %v103 = vld [vmem:[#allocation6] sm:$0xff]
    %v104 = vld [vmem:[#allocation6 + $0x10] sm:$0xff]
    %v105 = vld [vmem:[#allocation6 + $0x20] sm:$0xff]
    %v106 = vld [vmem:[#allocation6 + $0x30] sm:$0xff]
    %v107 = vld [vmem:[#allocation6 + $0x40] sm:$0xff]
    %v108 = vld [vmem:[#allocation6 + $0x50] sm:$0xff]
    %v109 = vld [vmem:[#allocation6 + $0x60] sm:$0xff]
    %v110 = vld [vmem:[#allocation6 + $0x70] sm:$0xff]
    %v111 = vld [vmem:[#allocation6 + $0x80] sm:$0xff]
    %v112 = vld [vmem:[#allocation6 + $0x90] sm:$0xff]
    %v113 = vld [vmem:[#allocation6 + $0xa0] sm:$0xff]
    %v114 = vld [vmem:[#allocation6 + $0xb0] sm:$0xff]
    %v115 = vld [vmem:[#allocation6 + $0xc0] sm:$0xff]
    %v116 = vld [vmem:[#allocation6 + $0xd0] sm:$0xff]
    %v117 = vld [vmem:[#allocation6 + $0xe0] sm:$0xff]
    %v118 = vld [vmem:[#allocation6 + $0xf0] sm:$0xff]
    %v119 = vld [vmem:[%s2] sm:$0x3]
    %v121 = vlaneseq
    %v122 = vshrl.u32 %v121, 7
    %v123 = vsub.s32 0, %v122
    %v124 = vrot.slane %v119, %v123
    %v125 = vlaneseq
    %v126 = vshrl.u32 %v125, 7
    %v127 = vsub.s32 1, %v126
    %v128 = vrot.slane %v119, %v127
    %v147 = vunpack.c.l.b16 %v103
    %v148 = vunpack.c.h.b16 %v103
    %v149 = vunpack.c.l.b16 %v104
    %v150 = vunpack.c.h.b16 %v104
    %v151 = vunpack.c.l.b16 %v105
    %v152 = vunpack.c.h.b16 %v105
    %v153 = vunpack.c.l.b16 %v106
    %v154 = vunpack.c.h.b16 %v106
    %v155 = vunpack.c.l.b16 %v107
    %v156 = vunpack.c.h.b16 %v107
    %v157 = vunpack.c.l.b16 %v108
    %v158 = vunpack.c.h.b16 %v108
    %v159 = vunpack.c.l.b16 %v109
    %v160 = vunpack.c.h.b16 %v109
    %v161 = vunpack.c.l.b16 %v110
    %v162 = vunpack.c.h.b16 %v110
    %v163 = vunpack.c.l.b16 %v111
    %v164 = vunpack.c.h.b16 %v111
    %v165 = vunpack.c.l.b16 %v112
    %v166 = vunpack.c.h.b16 %v112
    %v167 = vunpack.c.l.b16 %v113
    %v168 = vunpack.c.h.b16 %v113
    %v169 = vunpack.c.l.b16 %v114
    %v170 = vunpack.c.h.b16 %v114
    %v171 = vunpack.c.l.b16 %v115
    %v172 = vunpack.c.h.b16 %v115
    %v173 = vunpack.c.l.b16 %v116
    %v174 = vunpack.c.h.b16 %v116
    %v175 = vunpack.c.l.b16 %v117
    %v176 = vunpack.c.h.b16 %v117
    %v177 = vunpack.c.l.b16 %v118
    %v178 = vunpack.c.h.b16 %v118
    %v179 = vpack.c.b16 %v149, %v147
    %v180 = vpack.c.b16 %v150, %v148
    %v181 = vpack.c.b16 %v153, %v151
    %v182 = vpack.c.b16 %v154, %v152
    %v183 = vpack.c.b16 %v157, %v155
    %v184 = vpack.c.b16 %v158, %v156
    %v185 = vpack.c.b16 %v161, %v159
    %v186 = vpack.c.b16 %v162, %v160
    %v187 = vpack.c.b16 %v165, %v163
    %v188 = vpack.c.b16 %v166, %v164
    %v189 = vpack.c.b16 %v169, %v167
    %v190 = vpack.c.b16 %v170, %v168
    %v191 = vpack.c.b16 %v173, %v171
    %v192 = vpack.c.b16 %v174, %v172
    %v193 = vpack.c.b16 %v177, %v175
    %v194 = vpack.c.b16 %v178, %v176
    %211 = vmatprep.subr.bf16.mxu0 %v180
    %212 = vmatpush1.bf16.msra.mxu0 %v179
    %213 = vmatprep.subr.bf16.mxu0 %v182
    %214 = vmatpush1.bf16.msra.mxu0 %v181
    %215 = vmatprep.subr.bf16.mxu0 %v184
    %216 = vmatpush1.bf16.msra.mxu0 %v183
    %217 = vmatprep.subr.bf16.mxu0 %v186
    %218 = vmatpush1.bf16.msra.mxu0 %v185
    %219 = vmatprep.subr.bf16.mxu0 %v188
    %220 = vmatpush1.bf16.msra.mxu0 %v187
    %221 = vmatprep.subr.bf16.mxu0 %v190
    %222 = vmatpush1.bf16.msra.mxu0 %v189
    %223 = vmatprep.subr.bf16.mxu0 %v192
    %224 = vmatpush1.bf16.msra.mxu0 %v191
    %225 = vmatprep.subr.bf16.mxu0 %v194
    %226 = vmatpush1.bf16.msra.mxu0 %v193
    %227 = vmatprep.subr.bf16.mxu0 0
    %228 = vmatpush1.bf16.msra.mxu0 0
    %229 = vmatprep.subr.bf16.mxu0 0
    %230 = vmatpush1.bf16.msra.mxu0 0
    %231 = vmatprep.subr.bf16.mxu0 0
    %232 = vmatpush1.bf16.msra.mxu0 0
    %233 = vmatprep.subr.bf16.mxu0 0
    %234 = vmatpush1.bf16.msra.mxu0 0
    %235 = vmatprep.subr.bf16.mxu0 0
    %236 = vmatpush1.bf16.msra.mxu0 0
    %237 = vmatprep.subr.bf16.mxu0 0
    %238 = vmatpush1.bf16.msra.mxu0 0
    %239 = vmatprep.subr.bf16.mxu0 0
    %240 = vmatpush1.bf16.msra.mxu0 0
    %241 = vmatprep.subr.bf16.mxu0 0
    %242 = vmatpush1.bf16.msra.mxu0 0
    %243 = vmatprep.mubr.bf16.mxu0 0
    %244 = vmatmul.mubr.bf16.gmra.mrb[0].mxu0 %v79
    %v245 = vpop.f32.mrb[0].mxu0
    %v246 = vadd.f32 %v124, %v245
    %v247 = vpop.f32.mrb[0].mxu0
    %v248 = vadd.f32 %v128, %v247
    %v249 = vpop.f32.mrb[0].mxu0
    %v250 = vadd.f32 %v124, %v249
    %v251 = vpop.f32.mrb[0].mxu0
    %v252 = vadd.f32 %v128, %v251
    %253 = vmatprep.mubr.bf16.mxu0 0
    %254 = vmatmul.mubr.bf16.gmra.mrb[0].mxu0 %v80
    %v255 = vpop.f32.mrb[0].mxu0
    %v256 = vadd.f32 %v124, %v255
    %v257 = vpop.f32.mrb[0].mxu0
    %v258 = vadd.f32 %v128, %v257
    %v259 = vpop.f32.mrb[0].mxu0
    %v260 = vadd.f32 %v124, %v259
    %v261 = vpop.f32.mrb[0].mxu0
    %v262 = vadd.f32 %v128, %v261
    %263 = vmatprep.mubr.bf16.mxu0 0
    %264 = vmatmul.mubr.bf16.gmra.mrb[0].mxu0 %v81
    %v265 = vpop.f32.mrb[0].mxu0
    %v266 = vadd.f32 %v124, %v265
    %v267 = vpop.f32.mrb[0].mxu0
    %v268 = vadd.f32 %v128, %v267
    %v269 = vpop.f32.mrb[0].mxu0
    %v270 = vadd.f32 %v124, %v269
    %v271 = vpop.f32.mrb[0].mxu0
    %v272 = vadd.f32 %v128, %v271
    %273 = vmatprep.mubr.bf16.mxu0 0
    %274 = vmatmul.mubr.bf16.gmra.mrb[0].mxu0 %v82
    %v275 = vpop.f32.mrb[0].mxu0
    %v276 = vadd.f32 %v124, %v275
    %v277 = vpop.f32.mrb[0].mxu0
    %v278 = vadd.f32 %v128, %v277
    %v279 = vpop.f32.mrb[0].mxu0
    %v280 = vadd.f32 %v124, %v279
    %v281 = vpop.f32.mrb[0].mxu0
    %v282 = vadd.f32 %v128, %v281
    %283 = vmatprep.mubr.bf16.mxu0 0
    %284 = vmatmul.mubr.bf16.gmra.mrb[0].mxu0 %v83
    %v285 = vpop.f32.mrb[0].mxu0
    %v286 = vadd.f32 %v124, %v285
    %v287 = vpop.f32.mrb[0].mxu0
    %v288 = vadd.f32 %v128, %v287
    %v289 = vpop.f32.mrb[0].mxu0
    %v290 = vadd.f32 %v124, %v289
    %v291 = vpop.f32.mrb[0].mxu0
    %v292 = vadd.f32 %v128, %v291
    %293 = vmatprep.mubr.bf16.mxu0 0
    %294 = vmatmul.mubr.bf16.gmra.mrb[0].mxu0 %v84
    %v295 = vpop.f32.mrb[0].mxu0
    %v296 = vadd.f32 %v124, %v295
    %v297 = vpop.f32.mrb[0].mxu0
    %v298 = vadd.f32 %v128, %v297
    %v299 = vpop.f32.mrb[0].mxu0
    %v300 = vadd.f32 %v124, %v299
    %v301 = vpop.f32.mrb[0].mxu0
    %v302 = vadd.f32 %v128, %v301
    %303 = vmatprep.mubr.bf16.mxu0 0
    %304 = vmatmul.mubr.bf16.gmra.mrb[0].mxu0 %v85
    %v305 = vpop.f32.mrb[0].mxu0
    %v306 = vadd.f32 %v124, %v305
    %v307 = vpop.f32.mrb[0].mxu0
    %v308 = vadd.f32 %v128, %v307
    %v309 = vpop.f32.mrb[0].mxu0
    %v310 = vadd.f32 %v124, %v309
    %v311 = vpop.f32.mrb[0].mxu0
    %v312 = vadd.f32 %v128, %v311
    %313 = vmatprep.mubr.bf16.mxu0 0
    %314 = vmatmul.mubr.bf16.gmra.mrb[0].mxu0 %v86
    %v315 = vpop.f32.mrb[0].mxu0
    %v316 = vadd.f32 %v124, %v315
    %v317 = vpop.f32.mrb[0].mxu0
    %v318 = vadd.f32 %v128, %v317
    %v319 = vpop.f32.mrb[0].mxu0
    %v320 = vadd.f32 %v124, %v319
    %v321 = vpop.f32.mrb[0].mxu0
    %v322 = vadd.f32 %v128, %v321
    %323 = vdwg.mxu0
    %v324 = vsub.f32 0.0, %v248
    %v325 = vsub.f32 0.0, %v252
    %v326 = vsub.f32 0.0, %v258
    %v327 = vsub.f32 0.0, %v262
    %v328 = vsub.f32 0.0, %v268
    %v329 = vsub.f32 0.0, %v272
    %v330 = vsub.f32 0.0, %v278
    %v331 = vsub.f32 0.0, %v282
    %v332 = vsub.f32 0.0, %v288
    %v333 = vsub.f32 0.0, %v292
    %v334 = vsub.f32 0.0, %v298
    %v335 = vsub.f32 0.0, %v302
    %v336 = vsub.f32 0.0, %v308
    %v337 = vsub.f32 0.0, %v312
    %v338 = vsub.f32 0.0, %v318
    %v339 = vsub.f32 0.0, %v322
    %v340 = vmul.f32 %v324, 1.442695
    %v341 = vpow.pop %v340
    %v342 = vmul.f32 %v325, 1.442695
    %v343 = vpow.pop %v342
    %v344 = vmul.f32 %v326, 1.442695
    %v345 = vpow.pop %v344
    %v346 = vmul.f32 %v327, 1.442695
    %v347 = vpow.pop %v346
    %v348 = vmul.f32 %v328, 1.442695
    %v349 = vpow.pop %v348
    %v350 = vmul.f32 %v329, 1.442695
    %v351 = vpow.pop %v350
    %v352 = vmul.f32 %v330, 1.442695
    %v353 = vpow.pop %v352
    %v354 = vmul.f32 %v331, 1.442695
    %v355 = vpow.pop %v354
    %v356 = vmul.f32 %v332, 1.442695
    %v357 = vpow.pop %v356
    %v358 = vmul.f32 %v333, 1.442695
    %v359 = vpow.pop %v358
    %v360 = vmul.f32 %v334, 1.442695
    %v361 = vpow.pop %v360
    %v362 = vmul.f32 %v335, 1.442695
    %v363 = vpow.pop %v362
    %v364 = vmul.f32 %v336, 1.442695
    %v365 = vpow.pop %v364
    %v366 = vmul.f32 %v337, 1.442695
    %v367 = vpow.pop %v366
    %v368 = vmul.f32 %v338, 1.442695
    %v369 = vpow.pop %v368
    %v370 = vmul.f32 %v339, 1.442695
    %v371 = vpow.pop %v370
    %v372 = vadd.f32 %v341, 1.0
    %v373 = vadd.f32 %v343, 1.0
    %v374 = vadd.f32 %v345, 1.0
    %v375 = vadd.f32 %v347, 1.0
    %v376 = vadd.f32 %v349, 1.0
    %v377 = vadd.f32 %v351, 1.0
    %v378 = vadd.f32 %v353, 1.0
    %v379 = vadd.f32 %v355, 1.0
    %v380 = vadd.f32 %v357, 1.0
    %v381 = vadd.f32 %v359, 1.0
    %v382 = vadd.f32 %v361, 1.0
    %v383 = vadd.f32 %v363, 1.0
    %v384 = vadd.f32 %v365, 1.0
    %v385 = vadd.f32 %v367, 1.0
    %v386 = vadd.f32 %v369, 1.0
    %v387 = vadd.f32 %v371, 1.0
    %v388 = vrcp.pop %v372
    %v389 = vrcp.pop %v373
    %v390 = vrcp.pop %v374
    %v391 = vrcp.pop %v375
    %v392 = vrcp.pop %v376
    %v393 = vrcp.pop %v377
    %v394 = vrcp.pop %v378
    %v395 = vrcp.pop %v379
    %v396 = vrcp.pop %v380
    %v397 = vrcp.pop %v381
    %v398 = vrcp.pop %v382
    %v399 = vrcp.pop %v383
    %v400 = vrcp.pop %v384
    %v401 = vrcp.pop %v385
    %v402 = vrcp.pop %v386
    %v403 = vrcp.pop %v387
    %v404 = vmul.f32 %v248, %v388
    %v405 = vmul.f32 %v252, %v389
    %v406 = vmul.f32 %v258, %v390
    %v407 = vmul.f32 %v262, %v391
    %v408 = vmul.f32 %v268, %v392
    %v409 = vmul.f32 %v272, %v393
    %v410 = vmul.f32 %v278, %v394
    %v411 = vmul.f32 %v282, %v395
    %v412 = vmul.f32 %v288, %v396
    %v413 = vmul.f32 %v292, %v397
    %v414 = vmul.f32 %v298, %v398
    %v415 = vmul.f32 %v302, %v399
    %v416 = vmul.f32 %v308, %v400
    %v417 = vmul.f32 %v312, %v401
    %v418 = vmul.f32 %v318, %v402
    %v419 = vmul.f32 %v322, %v403
    %v420 = vmul.f32 %v404, %v246
    %v421 = vmul.f32 %v405, %v250
    %v422 = vmul.f32 %v406, %v256
    %v423 = vmul.f32 %v407, %v260
    %v424 = vmul.f32 %v408, %v266
    %v425 = vmul.f32 %v409, %v270
    %v426 = vmul.f32 %v410, %v276
    %v427 = vmul.f32 %v411, %v280
    %v428 = vmul.f32 %v412, %v286
    %v429 = vmul.f32 %v413, %v290
    %v430 = vmul.f32 %v414, %v296
    %v431 = vmul.f32 %v415, %v300
    %v432 = vmul.f32 %v416, %v306
    %v433 = vmul.f32 %v417, %v310
    %v434 = vmul.f32 %v418, %v316
    %v435 = vmul.f32 %v419, %v320
    %v436 = vpack.c.bf16 %v421, %v420
    %v437 = vpack.c.bf16 %v423, %v422
    %v438 = vpack.c.bf16 %v425, %v424
    %v439 = vpack.c.bf16 %v427, %v426
    %v440 = vpack.c.bf16 %v429, %v428
    %v441 = vpack.c.bf16 %v431, %v430
    %v442 = vpack.c.bf16 %v433, %v432
    %v443 = vpack.c.bf16 %v435, %v434
    %v444 = vld [vmem:[#allocation2] sm:$0xff]
    %v445 = vld [vmem:[#allocation2 + $0x8] sm:$0xff]
    %v446 = vld [vmem:[#allocation2 + $0x10] sm:$0xff]
    %v447 = vld [vmem:[#allocation2 + $0x18] sm:$0xff]
    %v448 = vld [vmem:[#allocation2 + $0x20] sm:$0xff]
    %v449 = vld [vmem:[#allocation2 + $0x28] sm:$0xff]
    %v450 = vld [vmem:[#allocation2 + $0x30] sm:$0xff]
    %v451 = vld [vmem:[#allocation2 + $0x38] sm:$0xff]
    %v452 = vld [vmem:[#allocation2 + $0x40] sm:$0xff]
    %v453 = vld [vmem:[#allocation2 + $0x48] sm:$0xff]
    %v454 = vld [vmem:[#allocation2 + $0x50] sm:$0xff]
    %v455 = vld [vmem:[#allocation2 + $0x58] sm:$0xff]
    %v456 = vld [vmem:[#allocation2 + $0x60] sm:$0xff]
    %v457 = vld [vmem:[#allocation2 + $0x68] sm:$0xff]
    %v458 = vld [vmem:[#allocation2 + $0x70] sm:$0xff]
    %v459 = vld [vmem:[#allocation2 + $0x78] sm:$0xff]
    %v460 = vld [vmem:[#allocation8] sm:$0xf]
    %v461 = vld [vmem:[#allocation8 + $0x4] sm:$0xf]
    %v462 = vld [vmem:[#allocation8 + $0x8] sm:$0xf]
    %v463 = vld [vmem:[#allocation8 + $0xc] sm:$0xf]
    %v464 = vld [vmem:[#allocation8 + $0x10] sm:$0xf]
    %v465 = vld [vmem:[#allocation8 + $0x14] sm:$0xf]
    %v466 = vld [vmem:[#allocation8 + $0x18] sm:$0xf]
    %v467 = vld [vmem:[#allocation8 + $0x1c] sm:$0xf]
    %v468 = vld [vmem:[#allocation8 + $0x20] sm:$0xf]
    %v469 = vld [vmem:[#allocation8 + $0x24] sm:$0xf]
    %v470 = vld [vmem:[#allocation8 + $0x28] sm:$0xf]
    %v471 = vld [vmem:[#allocation8 + $0x2c] sm:$0xf]
    %v472 = vld [vmem:[#allocation8 + $0x30] sm:$0xf]
    %v473 = vld [vmem:[#allocation8 + $0x34] sm:$0xf]
    %v474 = vld [vmem:[#allocation8 + $0x38] sm:$0xf]
    %v475 = vld [vmem:[#allocation8 + $0x3c] sm:$0xf]
    %v492 = vunpack.c.l.b16 %v460
    %v493 = vunpack.c.l.b16 %v461
    %v494 = vunpack.c.l.b16 %v462
    %v495 = vunpack.c.l.b16 %v463
    %v496 = vunpack.c.l.b16 %v464
    %v497 = vunpack.c.l.b16 %v465
    %v498 = vunpack.c.l.b16 %v466
    %v499 = vunpack.c.l.b16 %v467
    %v500 = vunpack.c.l.b16 %v468
    %v501 = vunpack.c.l.b16 %v469
    %v502 = vunpack.c.l.b16 %v470
    %v503 = vunpack.c.l.b16 %v471
    %v504 = vunpack.c.l.b16 %v472
    %v505 = vunpack.c.l.b16 %v473
    %v506 = vunpack.c.l.b16 %v474
    %v507 = vunpack.c.l.b16 %v475
    %v508 = vpack.c.b16 %v493, %v492
    %v509 = vpack.c.b16 %v495, %v494
    %v510 = vpack.c.b16 %v497, %v496
    %v511 = vpack.c.b16 %v499, %v498
    %v512 = vpack.c.b16 %v501, %v500
    %v513 = vpack.c.b16 %v503, %v502
    %v514 = vpack.c.b16 %v505, %v504
    %v515 = vpack.c.b16 %v507, %v506
    %524 = vmatprep.subr.bf16.mxu0 0
    %525 = vmatpush1.bf16.msra.mxu0 %v508
    %526 = vmatprep.subr.bf16.mxu0 0
    %527 = vmatpush1.bf16.msra.mxu0 %v509
    %528 = vmatprep.subr.bf16.mxu0 0
    %529 = vmatpush1.bf16.msra.mxu0 %v510
    %530 = vmatprep.subr.bf16.mxu0 0
    %531 = vmatpush1.bf16.msra.mxu0 %v511
    %532 = vmatprep.subr.bf16.mxu0 0
    %533 = vmatpush1.bf16.msra.mxu0 %v512
    %534 = vmatprep.subr.bf16.mxu0 0
    %535 = vmatpush1.bf16.msra.mxu0 %v513
    %536 = vmatprep.subr.bf16.mxu0 0
    %537 = vmatpush1.bf16.msra.mxu0 %v514
    %538 = vmatprep.subr.bf16.mxu0 0
    %539 = vmatpush1.bf16.msra.mxu0 %v515
    %540 = vmatprep.subr.bf16.mxu0 0
    %541 = vmatpush1.bf16.msra.mxu0 0
    %542 = vmatprep.subr.bf16.mxu0 0
    %543 = vmatpush1.bf16.msra.mxu0 0
    %544 = vmatprep.subr.bf16.mxu0 0
    %545 = vmatpush1.bf16.msra.mxu0 0
    %546 = vmatprep.subr.bf16.mxu0 0
    %547 = vmatpush1.bf16.msra.mxu0 0
    %548 = vmatprep.subr.bf16.mxu0 0
    %549 = vmatpush1.bf16.msra.mxu0 0
    %550 = vmatprep.subr.bf16.mxu0 0
    %551 = vmatpush1.bf16.msra.mxu0 0
    %552 = vmatprep.subr.bf16.mxu0 0
    %553 = vmatpush1.bf16.msra.mxu0 0
    %554 = vmatprep.subr.bf16.mxu0 0
    %555 = vmatpush1.bf16.msra.mxu0 0
    %556 = vmatprep.mubr.bf16.mxu0 0
    %557 = vmatmul.mubr.bf16.gmra.mrb[0].mxu0 %v436
    %v558 = vpop.f32.mrb[0].mxu0
    %v559 = vadd.f32 0.0, %v558
    %v560 = vpop.f32.mrb[0].mxu0
    %v561 = vpop.f32.mrb[0].mxu0
    %v562 = vadd.f32 0.0, %v561
    %v563 = vpop.f32.mrb[0].mxu0
    %564 = vmatprep.mubr.bf16.mxu0 0
    %565 = vmatmul.mubr.bf16.gmra.mrb[0].mxu0 %v437
    %v566 = vpop.f32.mrb[0].mxu0
    %v567 = vadd.f32 0.0, %v566
    %v568 = vpop.f32.mrb[0].mxu0
    %v569 = vpop.f32.mrb[0].mxu0
    %v570 = vadd.f32 0.0, %v569
    %v571 = vpop.f32.mrb[0].mxu0
    %572 = vmatprep.mubr.bf16.mxu0 0
    %573 = vmatmul.mubr.bf16.gmra.mrb[0].mxu0 %v438
    %v574 = vpop.f32.mrb[0].mxu0
    %v575 = vadd.f32 0.0, %v574
    %v576 = vpop.f32.mrb[0].mxu0
    %v577 = vpop.f32.mrb[0].mxu0
    %v578 = vadd.f32 0.0, %v577
    %v579 = vpop.f32.mrb[0].mxu0
    %580 = vmatprep.mubr.bf16.mxu0 0
    %581 = vmatmul.mubr.bf16.gmra.mrb[0].mxu0 %v439
    %v582 = vpop.f32.mrb[0].mxu0
    %v583 = vadd.f32 0.0, %v582
    %v584 = vpop.f32.mrb[0].mxu0
    %v585 = vpop.f32.mrb[0].mxu0
    %v586 = vadd.f32 0.0, %v585
    %v587 = vpop.f32.mrb[0].mxu0
    %588 = vmatprep.mubr.bf16.mxu0 0
    %589 = vmatmul.mubr.bf16.gmra.mrb[0].mxu0 %v440
    %v590 = vpop.f32.mrb[0].mxu0
    %v591 = vadd.f32 0.0, %v590
    %v592 = vpop.f32.mrb[0].mxu0
    %v593 = vpop.f32.mrb[0].mxu0
    %v594 = vadd.f32 0.0, %v593
    %v595 = vpop.f32.mrb[0].mxu0
    %596 = vmatprep.mubr.bf16.mxu0 0
    %597 = vmatmul.mubr.bf16.gmra.mrb[0].mxu0 %v441
    %v598 = vpop.f32.mrb[0].mxu0
    %v599 = vadd.f32 0.0, %v598
    %v600 = vpop.f32.mrb[0].mxu0
    %v601 = vpop.f32.mrb[0].mxu0
    %v602 = vadd.f32 0.0, %v601
    %v603 = vpop.f32.mrb[0].mxu0
    %604 = vmatprep.mubr.bf16.mxu0 0
    %605 = vmatmul.mubr.bf16.gmra.mrb[0].mxu0 %v442
    %v606 = vpop.f32.mrb[0].mxu0
    %v607 = vadd.f32 0.0, %v606
    %v608 = vpop.f32.mrb[0].mxu0
    %v609 = vpop.f32.mrb[0].mxu0
    %v610 = vadd.f32 0.0, %v609
    %v611 = vpop.f32.mrb[0].mxu0
    %612 = vmatprep.mubr.bf16.mxu0 0
    %613 = vmatmul.mubr.bf16.gmra.mrb[0].mxu0 %v443
    %v614 = vpop.f32.mrb[0].mxu0
    %v615 = vadd.f32 0.0, %v614
    %v616 = vpop.f32.mrb[0].mxu0
    %v617 = vpop.f32.mrb[0].mxu0
    %v618 = vadd.f32 0.0, %v617
    %v619 = vpop.f32.mrb[0].mxu0
    %620 = vdwg.mxu0
    %v621 = vadd.f32 %v444, %v559
    %v622 = vadd.f32 %v445, %v562
    %v623 = vadd.f32 %v446, %v567
    %v624 = vadd.f32 %v447, %v570
    %v625 = vadd.f32 %v448, %v575
    %v626 = vadd.f32 %v449, %v578
    %v627 = vadd.f32 %v450, %v583
    %v628 = vadd.f32 %v451, %v586
    %v629 = vadd.f32 %v452, %v591
    %v630 = vadd.f32 %v453, %v594
    %v631 = vadd.f32 %v454, %v599
    %v632 = vadd.f32 %v455, %v602
    %v633 = vadd.f32 %v456, %v607
    %v634 = vadd.f32 %v457, %v610
    %v635 = vadd.f32 %v458, %v615
    %v636 = vadd.f32 %v459, %v618
    %637 = vst [vmem:[#allocation2] sm:$0xff] %v621
    %638 = vst [vmem:[#allocation2 + $0x8] sm:$0xff] %v622
    %639 = vst [vmem:[#allocation2 + $0x10] sm:$0xff] %v623
    %640 = vst [vmem:[#allocation2 + $0x18] sm:$0xff] %v624
    %641 = vst [vmem:[#allocation2 + $0x20] sm:$0xff] %v625
    %642 = vst [vmem:[#allocation2 + $0x28] sm:$0xff] %v626
    %643 = vst [vmem:[#allocation2 + $0x30] sm:$0xff] %v627
    %644 = vst [vmem:[#allocation2 + $0x38] sm:$0xff] %v628
    %645 = vst [vmem:[#allocation2 + $0x40] sm:$0xff] %v629
    %646 = vst [vmem:[#allocation2 + $0x48] sm:$0xff] %v630
    %647 = vst [vmem:[#allocation2 + $0x50] sm:$0xff] %v631
    %648 = vst [vmem:[#allocation2 + $0x58] sm:$0xff] %v632
    %649 = vst [vmem:[#allocation2 + $0x60] sm:$0xff] %v633
    %650 = vst [vmem:[#allocation2 + $0x68] sm:$0xff] %v634
    %651 = vst [vmem:[#allocation2 + $0x70] sm:$0xff] %v635
    %652 = vst [vmem:[#allocation2 + $0x78] sm:$0xff] %v636
    %v653 = vld [vmem:[#allocation6 + $0x8] sm:$0xff]
    %v654 = vld [vmem:[#allocation6 + $0x18] sm:$0xff]
    %v655 = vld [vmem:[#allocation6 + $0x28] sm:$0xff]
    %v656 = vld [vmem:[#allocation6 + $0x38] sm:$0xff]
    %v657 = vld [vmem:[#allocation6 + $0x48] sm:$0xff]
    %v658 = vld [vmem:[#allocation6 + $0x58] sm:$0xff]
    %v659 = vld [vmem:[#allocation6 + $0x68] sm:$0xff]
    %v660 = vld [vmem:[#allocation6 + $0x78] sm:$0xff]
    %v661 = vld [vmem:[#allocation6 + $0x88] sm:$0xff]
    %v662 = vld [vmem:[#allocation6 + $0x98] sm:$0xff]
    %v663 = vld [vmem:[#allocation6 + $0xa8] sm:$0xff]
    %v664 = vld [vmem:[#allocation6 + $0xb8] sm:$0xff]
    %v665 = vld [vmem:[#allocation6 + $0xc8] sm:$0xff]
    %v666 = vld [vmem:[#allocation6 + $0xd8] sm:$0xff]
    %v667 = vld [vmem:[#allocation6 + $0xe8] sm:$0xff]
    %v668 = vld [vmem:[#allocation6 + $0xf8] sm:$0xff]
    %v669 = vld [vmem:[%s2 + $0x2] sm:$0x3]
    %v671 = vlaneseq
    %v672 = vshrl.u32 %v671, 7
    %v673 = vsub.s32 0, %v672
    %v674 = vrot.slane %v669, %v673
    %v675 = vlaneseq
    %v676 = vshrl.u32 %v675, 7
    %v677 = vsub.s32 1, %v676
    %v678 = vrot.slane %v669, %v677
    %v697 = vunpack.c.l.b16 %v653
    %v698 = vunpack.c.h.b16 %v653
    %v699 = vunpack.c.l.b16 %v654
    %v700 = vunpack.c.h.b16 %v654
    %v701 = vunpack.c.l.b16 %v655
    %v702 = vunpack.c.h.b16 %v655
    %v703 = vunpack.c.l.b16 %v656
    %v704 = vunpack.c.h.b16 %v656
    %v705 = vunpack.c.l.b16 %v657
    %v706 = vunpack.c.h.b16 %v657
    %v707 = vunpack.c.l.b16 %v658
    %v708 = vunpack.c.h.b16 %v658
    %v709 = vunpack.c.l.b16 %v659
    %v710 = vunpack.c.h.b16 %v659
    %v711 = vunpack.c.l.b16 %v660
    %v712 = vunpack.c.h.b16 %v660
    %v713 = vunpack.c.l.b16 %v661
    %v714 = vunpack.c.h.b16 %v661
    %v715 = vunpack.c.l.b16 %v662
    %v716 = vunpack.c.h.b16 %v662
    %v717 = vunpack.c.l.b16 %v663
    %v718 = vunpack.c.h.b16 %v663
    %v719 = vunpack.c.l.b16 %v664
    %v720 = vunpack.c.h.b16 %v664
    %v721 = vunpack.c.l.b16 %v665
    %v722 = vunpack.c.h.b16 %v665
    %v723 = vunpack.c.l.b16 %v666
    %v724 = vunpack.c.h.b16 %v666
    %v725 = vunpack.c.l.b16 %v667
    %v726 = vunpack.c.h.b16 %v667
    %v727 = vunpack.c.l.b16 %v668
    %v728 = vunpack.c.h.b16 %v668
    %v729 = vpack.c.b16 %v699, %v697
    %v730 = vpack.c.b16 %v700, %v698
    %v731 = vpack.c.b16 %v703, %v701
    %v732 = vpack.c.b16 %v704, %v702
    %v733 = vpack.c.b16 %v707, %v705
    %v734 = vpack.c.b16 %v708, %v706
    %v735 = vpack.c.b16 %v711, %v709
    %v736 = vpack.c.b16 %v712, %v710
    %v737 = vpack.c.b16 %v715, %v713
    %v738 = vpack.c.b16 %v716, %v714
    %v739 = vpack.c.b16 %v719, %v717
    %v740 = vpack.c.b16 %v720, %v718
    %v741 = vpack.c.b16 %v723, %v721
    %v742 = vpack.c.b16 %v724, %v722
    %v743 = vpack.c.b16 %v727, %v725
    %v744 = vpack.c.b16 %v728, %v726
    %761 = vmatprep.subr.bf16.mxu0 %v730
    %762 = vmatpush1.bf16.msra.mxu0 %v729
    %763 = vmatprep.subr.bf16.mxu0 %v732
    %764 = vmatpush1.bf16.msra.mxu0 %v731
    %765 = vmatprep.subr.bf16.mxu0 %v734
    %766 = vmatpush1.bf16.msra.mxu0 %v733
    %767 = vmatprep.subr.bf16.mxu0 %v736
    %768 = vmatpush1.bf16.msra.mxu0 %v735
    %769 = vmatprep.subr.bf16.mxu0 %v738
    %770 = vmatpush1.bf16.msra.mxu0 %v737
    %771 = vmatprep.subr.bf16.mxu0 %v740
    %772 = vmatpush1.bf16.msra.mxu0 %v739
    %773 = vmatprep.subr.bf16.mxu0 %v742
    %774 = vmatpush1.bf16.msra.mxu0 %v741
    %775 = vmatprep.subr.bf16.mxu0 %v744
    %776 = vmatpush1.bf16.msra.mxu0 %v743
    %777 = vmatprep.subr.bf16.mxu0 0
    %778 = vmatpush1.bf16.msra.mxu0 0
    %779 = vmatprep.subr.bf16.mxu0 0
    %780 = vmatpush1.bf16.msra.mxu0 0
    %781 = vmatprep.subr.bf16.mxu0 0
    %782 = vmatpush1.bf16.msra.mxu0 0
    %783 = vmatprep.subr.bf16.mxu0 0
    %784 = vmatpush1.bf16.msra.mxu0 0
    %785 = vmatprep.subr.bf16.mxu0 0
    %786 = vmatpush1.bf16.msra.mxu0 0
    %787 = vmatprep.subr.bf16.mxu0 0
    %788 = vmatpush1.bf16.msra.mxu0 0
    %789 = vmatprep.subr.bf16.mxu0 0
    %790 = vmatpush1.bf16.msra.mxu0 0
    %791 = vmatprep.subr.bf16.mxu0 0
    %792 = vmatpush1.bf16.msra.mxu0 0
    %793 = vmatprep.mubr.bf16.mxu0 0
    %794 = vmatmul.mubr.bf16.gmra.mrb[0].mxu0 %v79
    %v795 = vpop.f32.mrb[0].mxu0
    %v796 = vadd.f32 %v674, %v795
    %v797 = vpop.f32.mrb[0].mxu0
    %v798 = vadd.f32 %v678, %v797
    %v799 = vpop.f32.mrb[0].mxu0
    %v800 = vadd.f32 %v674, %v799
    %v801 = vpop.f32.mrb[0].mxu0
    %v802 = vadd.f32 %v678, %v801
    %803 = vmatprep.mubr.bf16.mxu0 0
    %804 = vmatmul.mubr.bf16.gmra.mrb[0].mxu0 %v80
    %v805 = vpop.f32.mrb[0].mxu0
    %v806 = vadd.f32 %v674, %v805
    %v807 = vpop.f32.mrb[0].mxu0
    %v808 = vadd.f32 %v678, %v807
    %v809 = vpop.f32.mrb[0].mxu0
    %v810 = vadd.f32 %v674, %v809
    %v811 = vpop.f32.mrb[0].mxu0
    %v812 = vadd.f32 %v678, %v811
    %813 = vmatprep.mubr.bf16.mxu0 0
    %814 = vmatmul.mubr.bf16.gmra.mrb[0].mxu0 %v81
    %v815 = vpop.f32.mrb[0].mxu0
    %v816 = vadd.f32 %v674, %v815
    %v817 = vpop.f32.mrb[0].mxu0
    %v818 = vadd.f32 %v678, %v817
    %v819 = vpop.f32.mrb[0].mxu0
    %v820 = vadd.f32 %v674, %v819
    %v821 = vpop.f32.mrb[0].mxu0
    %v822 = vadd.f32 %v678, %v821
    %823 = vmatprep.mubr.bf16.mxu0 0
    %824 = vmatmul.mubr.bf16.gmra.mrb[0].mxu0 %v82
    %v825 = vpop.f32.mrb[0].mxu0
    %v826 = vadd.f32 %v674, %v825
    %v827 = vpop.f32.mrb[0].mxu0
    %v828 = vadd.f32 %v678, %v827
    %v829 = vpop.f32.mrb[0].mxu0
    %v830 = vadd.f32 %v674, %v829
    %v831 = vpop.f32.mrb[0].mxu0
    %v832 = vadd.f32 %v678, %v831
    %833 = vmatprep.mubr.bf16.mxu0 0
    %834 = vmatmul.mubr.bf16.gmra.mrb[0].mxu0 %v83
    %v835 = vpop.f32.mrb[0].mxu0
    %v836 = vadd.f32 %v674, %v835
    %v837 = vpop.f32.mrb[0].mxu0
    %v838 = vadd.f32 %v678, %v837
    %v839 = vpop.f32.mrb[0].mxu0
    %v840 = vadd.f32 %v674, %v839
    %v841 = vpop.f32.mrb[0].mxu0
    %v842 = vadd.f32 %v678, %v841
    %843 = vmatprep.mubr.bf16.mxu0 0
    %844 = vmatmul.mubr.bf16.gmra.mrb[0].mxu0 %v84
    %v845 = vpop.f32.mrb[0].mxu0
    %v846 = vadd.f32 %v674, %v845
    %v847 = vpop.f32.mrb[0].mxu0
    %v848 = vadd.f32 %v678, %v847
    %v849 = vpop.f32.mrb[0].mxu0
    %v850 = vadd.f32 %v674, %v849
    %v851 = vpop.f32.mrb[0].mxu0
    %v852 = vadd.f32 %v678, %v851
    %853 = vmatprep.mubr.bf16.mxu0 0
    %854 = vmatmul.mubr.bf16.gmra.mrb[0].mxu0 %v85
    %v855 = vpop.f32.mrb[0].mxu0
    %v856 = vadd.f32 %v674, %v855
    %v857 = vpop.f32.mrb[0].mxu0
    %v858 = vadd.f32 %v678, %v857
    %v859 = vpop.f32.mrb[0].mxu0
    %v860 = vadd.f32 %v674, %v859
    %v861 = vpop.f32.mrb[0].mxu0
    %v862 = vadd.f32 %v678, %v861
    %863 = vmatprep.mubr.bf16.mxu0 0
    %864 = vmatmul.mubr.bf16.gmra.mrb[0].mxu0 %v86
    %v865 = vpop.f32.mrb[0].mxu0
    %v866 = vadd.f32 %v674, %v865
    %v867 = vpop.f32.mrb[0].mxu0
    %v868 = vadd.f32 %v678, %v867
    %v869 = vpop.f32.mrb[0].mxu0
    %v870 = vadd.f32 %v674, %v869
    %v871 = vpop.f32.mrb[0].mxu0
    %v872 = vadd.f32 %v678, %v871
    %873 = vdwg.mxu0
    %v874 = vsub.f32 0.0, %v798
    %v875 = vsub.f32 0.0, %v802
    %v876 = vsub.f32 0.0, %v808
    %v877 = vsub.f32 0.0, %v812
    %v878 = vsub.f32 0.0, %v818
    %v879 = vsub.f32 0.0, %v822
    %v880 = vsub.f32 0.0, %v828
    %v881 = vsub.f32 0.0, %v832
    %v882 = vsub.f32 0.0, %v838
    %v883 = vsub.f32 0.0, %v842
    %v884 = vsub.f32 0.0, %v848
    %v885 = vsub.f32 0.0, %v852
    %v886 = vsub.f32 0.0, %v858
    %v887 = vsub.f32 0.0, %v862
    %v888 = vsub.f32 0.0, %v868
    %v889 = vsub.f32 0.0, %v872
    %v890 = vmul.f32 %v874, 1.442695
    %v891 = vpow.pop %v890
    %v892 = vmul.f32 %v875, 1.442695
    %v893 = vpow.pop %v892
    %v894 = vmul.f32 %v876, 1.442695
    %v895 = vpow.pop %v894
    %v896 = vmul.f32 %v877, 1.442695
    %v897 = vpow.pop %v896
    %v898 = vmul.f32 %v878, 1.442695
    %v899 = vpow.pop %v898
    %v900 = vmul.f32 %v879, 1.442695
    %v901 = vpow.pop %v900
    %v902 = vmul.f32 %v880, 1.442695
    %v903 = vpow.pop %v902
    %v904 = vmul.f32 %v881, 1.442695
    %v905 = vpow.pop %v904
    %v906 = vmul.f32 %v882, 1.442695
    %v907 = vpow.pop %v906
    %v908 = vmul.f32 %v883, 1.442695
    %v909 = vpow.pop %v908
    %v910 = vmul.f32 %v884, 1.442695
    %v911 = vpow.pop %v910
    %v912 = vmul.f32 %v885, 1.442695
    %v913 = vpow.pop %v912
    %v914 = vmul.f32 %v886, 1.442695
    %v915 = vpow.pop %v914
    %v916 = vmul.f32 %v887, 1.442695
    %v917 = vpow.pop %v916
    %v918 = vmul.f32 %v888, 1.442695
    %v919 = vpow.pop %v918
    %v920 = vmul.f32 %v889, 1.442695
    %v921 = vpow.pop %v920
    %v922 = vadd.f32 %v891, 1.0
    %v923 = vadd.f32 %v893, 1.0
    %v924 = vadd.f32 %v895, 1.0
    %v925 = vadd.f32 %v897, 1.0
    %v926 = vadd.f32 %v899, 1.0
    %v927 = vadd.f32 %v901, 1.0
    %v928 = vadd.f32 %v903, 1.0
    %v929 = vadd.f32 %v905, 1.0
    %v930 = vadd.f32 %v907, 1.0
    %v931 = vadd.f32 %v909, 1.0
    %v932 = vadd.f32 %v911, 1.0
    %v933 = vadd.f32 %v913, 1.0
    %v934 = vadd.f32 %v915, 1.0
    %v935 = vadd.f32 %v917, 1.0
    %v936 = vadd.f32 %v919, 1.0
    %v937 = vadd.f32 %v921, 1.0
    %v938 = vrcp.pop %v922
    %v939 = vrcp.pop %v923
    %v940 = vrcp.pop %v924
    %v941 = vrcp.pop %v925
    %v942 = vrcp.pop %v926
    %v943 = vrcp.pop %v927
    %v944 = vrcp.pop %v928
    %v945 = vrcp.pop %v929
    %v946 = vrcp.pop %v930
    %v947 = vrcp.pop %v931
    %v948 = vrcp.pop %v932
    %v949 = vrcp.pop %v933
    %v950 = vrcp.pop %v934
    %v951 = vrcp.pop %v935
    %v952 = vrcp.pop %v936
    %v953 = vrcp.pop %v937
    %v954 = vmul.f32 %v798, %v938
    %v955 = vmul.f32 %v802, %v939
    %v956 = vmul.f32 %v808, %v940
    %v957 = vmul.f32 %v812, %v941
    %v958 = vmul.f32 %v818, %v942
    %v959 = vmul.f32 %v822, %v943
    %v960 = vmul.f32 %v828, %v944
    %v961 = vmul.f32 %v832, %v945
    %v962 = vmul.f32 %v838, %v946
    %v963 = vmul.f32 %v842, %v947
    %v964 = vmul.f32 %v848, %v948
    %v965 = vmul.f32 %v852, %v949
    %v966 = vmul.f32 %v858, %v950
    %v967 = vmul.f32 %v862, %v951
    %v968 = vmul.f32 %v868, %v952
    %v969 = vmul.f32 %v872, %v953
    %v970 = vmul.f32 %v954, %v796
    %v971 = vmul.f32 %v955, %v800
    %v972 = vmul.f32 %v956, %v806
    %v973 = vmul.f32 %v957, %v810
    %v974 = vmul.f32 %v958, %v816
    %v975 = vmul.f32 %v959, %v820
    %v976 = vmul.f32 %v960, %v826
    %v977 = vmul.f32 %v961, %v830
    %v978 = vmul.f32 %v962, %v836
    %v979 = vmul.f32 %v963, %v840
    %v980 = vmul.f32 %v964, %v846
    %v981 = vmul.f32 %v965, %v850
    %v982 = vmul.f32 %v966, %v856
    %v983 = vmul.f32 %v967, %v860
    %v984 = vmul.f32 %v968, %v866
    %v985 = vmul.f32 %v969, %v870
    %v986 = vpack.c.bf16 %v971, %v970
    %v987 = vpack.c.bf16 %v973, %v972
    %v988 = vpack.c.bf16 %v975, %v974
    %v989 = vpack.c.bf16 %v977, %v976
    %v990 = vpack.c.bf16 %v979, %v978
    %v991 = vpack.c.bf16 %v981, %v980
    %v992 = vpack.c.bf16 %v983, %v982
    %v993 = vpack.c.bf16 %v985, %v984
    %v994 = vld [vmem:[#allocation2] sm:$0xff]
    %v995 = vld [vmem:[#allocation2 + $0x8] sm:$0xff]
    %v996 = vld [vmem:[#allocation2 + $0x10] sm:$0xff]
    %v997 = vld [vmem:[#allocation2 + $0x18] sm:$0xff]
    %v998 = vld [vmem:[#allocation2 + $0x20] sm:$0xff]
    %v999 = vld [vmem:[#allocation2 + $0x28] sm:$0xff]
    %v1000 = vld [vmem:[#allocation2 + $0x30] sm:$0xff]
    %v1001 = vld [vmem:[#allocation2 + $0x38] sm:$0xff]
    %v1002 = vld [vmem:[#allocation2 + $0x40] sm:$0xff]
    %v1003 = vld [vmem:[#allocation2 + $0x48] sm:$0xff]
    %v1004 = vld [vmem:[#allocation2 + $0x50] sm:$0xff]
    %v1005 = vld [vmem:[#allocation2 + $0x58] sm:$0xff]
    %v1006 = vld [vmem:[#allocation2 + $0x60] sm:$0xff]
    %v1007 = vld [vmem:[#allocation2 + $0x68] sm:$0xff]
    %v1008 = vld [vmem:[#allocation2 + $0x70] sm:$0xff]
    %v1009 = vld [vmem:[#allocation2 + $0x78] sm:$0xff]
    %v1010 = vld [vmem:[#allocation8 + $0x40] sm:$0xf]
    %v1011 = vld [vmem:[#allocation8 + $0x44] sm:$0xf]
    %v1012 = vld [vmem:[#allocation8 + $0x48] sm:$0xf]
    %v1013 = vld [vmem:[#allocation8 + $0x4c] sm:$0xf]
    %v1014 = vld [vmem:[#allocation8 + $0x50] sm:$0xf]
    %v1015 = vld [vmem:[#allocation8 + $0x54] sm:$0xf]
    %v1016 = vld [vmem:[#allocation8 + $0x58] sm:$0xf]
    %v1017 = vld [vmem:[#allocation8 + $0x5c] sm:$0xf]
    %v1018 = vld [vmem:[#allocation8 + $0x60] sm:$0xf]
    %v1019 = vld [vmem:[#allocation8 + $0x64] sm:$0xf]
    %v1020 = vld [vmem:[#allocation8 + $0x68] sm:$0xf]
    %v1021 = vld [vmem:[#allocation8 + $0x6c] sm:$0xf]
    %v1022 = vld [vmem:[#allocation8 + $0x70] sm:$0xf]
    %v1023 = vld [vmem:[#allocation8 + $0x74] sm:$0xf]
    %v1024 = vld [vmem:[#allocation8 + $0x78] sm:$0xf]
    %v1025 = vld [vmem:[#allocation8 + $0x7c] sm:$0xf]
    %v1042 = vunpack.c.l.b16 %v1010
    %v1043 = vunpack.c.l.b16 %v1011
    %v1044 = vunpack.c.l.b16 %v1012
    %v1045 = vunpack.c.l.b16 %v1013
    %v1046 = vunpack.c.l.b16 %v1014
    %v1047 = vunpack.c.l.b16 %v1015
    %v1048 = vunpack.c.l.b16 %v1016
    %v1049 = vunpack.c.l.b16 %v1017
    %v1050 = vunpack.c.l.b16 %v1018
    %v1051 = vunpack.c.l.b16 %v1019
    %v1052 = vunpack.c.l.b16 %v1020
    %v1053 = vunpack.c.l.b16 %v1021
    %v1054 = vunpack.c.l.b16 %v1022
    %v1055 = vunpack.c.l.b16 %v1023
    %v1056 = vunpack.c.l.b16 %v1024
    %v1057 = vunpack.c.l.b16 %v1025
    %v1058 = vpack.c.b16 %v1043, %v1042
    %v1059 = vpack.c.b16 %v1045, %v1044
    %v1060 = vpack.c.b16 %v1047, %v1046
    %v1061 = vpack.c.b16 %v1049, %v1048
    %v1062 = vpack.c.b16 %v1051, %v1050
    %v1063 = vpack.c.b16 %v1053, %v1052
    %v1064 = vpack.c.b16 %v1055, %v1054
    %v1065 = vpack.c.b16 %v1057, %v1056
    %1074 = vmatprep.subr.bf16.mxu0 0
    %1075 = vmatpush1.bf16.msra.mxu0 %v1058
    %1076 = vmatprep.subr.bf16.mxu0 0
    %1077 = vmatpush1.bf16.msra.mxu0 %v1059
    %1078 = vmatprep.subr.bf16.mxu0 0
    %1079 = vmatpush1.bf16.msra.mxu0 %v1060
    %1080 = vmatprep.subr.bf16.mxu0 0
    %1081 = vmatpush1.bf16.msra.mxu0 %v1061
    %1082 = vmatprep.subr.bf16.mxu0 0
    %1083 = vmatpush1.bf16.msra.mxu0 %v1062
    %1084 = vmatprep.subr.bf16.mxu0 0
    %1085 = vmatpush1.bf16.msra.mxu0 %v1063
    %1086 = vmatprep.subr.bf16.mxu0 0
    %1087 = vmatpush1.bf16.msra.mxu0 %v1064
    %1088 = vmatprep.subr.bf16.mxu0 0
    %1089 = vmatpush1.bf16.msra.mxu0 %v1065
    %1090 = vmatprep.subr.bf16.mxu0 0
    %1091 = vmatpush1.bf16.msra.mxu0 0
    %1092 = vmatprep.subr.bf16.mxu0 0
    %1093 = vmatpush1.bf16.msra.mxu0 0
    %1094 = vmatprep.subr.bf16.mxu0 0
    %1095 = vmatpush1.bf16.msra.mxu0 0
    %1096 = vmatprep.subr.bf16.mxu0 0
    %1097 = vmatpush1.bf16.msra.mxu0 0
    %1098 = vmatprep.subr.bf16.mxu0 0
    %1099 = vmatpush1.bf16.msra.mxu0 0
    %1100 = vmatprep.subr.bf16.mxu0 0
    %1101 = vmatpush1.bf16.msra.mxu0 0
    %1102 = vmatprep.subr.bf16.mxu0 0
    %1103 = vmatpush1.bf16.msra.mxu0 0
    %1104 = vmatprep.subr.bf16.mxu0 0
    %1105 = vmatpush1.bf16.msra.mxu0 0
    %1106 = vmatprep.mubr.bf16.mxu0 0
    %1107 = vmatmul.mubr.bf16.gmra.mrb[0].mxu0 %v986
    %v1108 = vpop.f32.mrb[0].mxu0
    %v1109 = vadd.f32 0.0, %v1108
    %v1110 = vpop.f32.mrb[0].mxu0
    %v1111 = vpop.f32.mrb[0].mxu0
    %v1112 = vadd.f32 0.0, %v1111
    %v1113 = vpop.f32.mrb[0].mxu0
    %1114 = vmatprep.mubr.bf16.mxu0 0
    %1115 = vmatmul.mubr.bf16.gmra.mrb[0].mxu0 %v987
    %v1116 = vpop.f32.mrb[0].mxu0
    %v1117 = vadd.f32 0.0, %v1116
    %v1118 = vpop.f32.mrb[0].mxu0
    %v1119 = vpop.f32.mrb[0].mxu0
    %v1120 = vadd.f32 0.0, %v1119
    %v1121 = vpop.f32.mrb[0].mxu0
    %1122 = vmatprep.mubr.bf16.mxu0 0
    %1123 = vmatmul.mubr.bf16.gmra.mrb[0].mxu0 %v988
    %v1124 = vpop.f32.mrb[0].mxu0
    %v1125 = vadd.f32 0.0, %v1124
    %v1126 = vpop.f32.mrb[0].mxu0
    %v1127 = vpop.f32.mrb[0].mxu0
    %v1128 = vadd.f32 0.0, %v1127
    %v1129 = vpop.f32.mrb[0].mxu0
    %1130 = vmatprep.mubr.bf16.mxu0 0
    %1131 = vmatmul.mubr.bf16.gmra.mrb[0].mxu0 %v989
    %v1132 = vpop.f32.mrb[0].mxu0
    %v1133 = vadd.f32 0.0, %v1132
    %v1134 = vpop.f32.mrb[0].mxu0
    %v1135 = vpop.f32.mrb[0].mxu0
    %v1136 = vadd.f32 0.0, %v1135
    %v1137 = vpop.f32.mrb[0].mxu0
    %1138 = vmatprep.mubr.bf16.mxu0 0
    %1139 = vmatmul.mubr.bf16.gmra.mrb[0].mxu0 %v990
    %v1140 = vpop.f32.mrb[0].mxu0
    %v1141 = vadd.f32 0.0, %v1140
    %v1142 = vpop.f32.mrb[0].mxu0
    %v1143 = vpop.f32.mrb[0].mxu0
    %v1144 = vadd.f32 0.0, %v1143
    %v1145 = vpop.f32.mrb[0].mxu0
    %1146 = vmatprep.mubr.bf16.mxu0 0
    %1147 = vmatmul.mubr.bf16.gmra.mrb[0].mxu0 %v991
    %v1148 = vpop.f32.mrb[0].mxu0
    %v1149 = vadd.f32 0.0, %v1148
    %v1150 = vpop.f32.mrb[0].mxu0
    %v1151 = vpop.f32.mrb[0].mxu0
    %v1152 = vadd.f32 0.0, %v1151
    %v1153 = vpop.f32.mrb[0].mxu0
    %1154 = vmatprep.mubr.bf16.mxu0 0
    %1155 = vmatmul.mubr.bf16.gmra.mrb[0].mxu0 %v992
    %v1156 = vpop.f32.mrb[0].mxu0
    %v1157 = vadd.f32 0.0, %v1156
    %v1158 = vpop.f32.mrb[0].mxu0
    %v1159 = vpop.f32.mrb[0].mxu0
    %v1160 = vadd.f32 0.0, %v1159
    %v1161 = vpop.f32.mrb[0].mxu0
    %1162 = vmatprep.mubr.bf16.mxu0 0
    %1163 = vmatmul.mubr.bf16.gmra.mrb[0].mxu0 %v993
    %v1164 = vpop.f32.mrb[0].mxu0
    %v1165 = vadd.f32 0.0, %v1164
    %v1166 = vpop.f32.mrb[0].mxu0
    %v1167 = vpop.f32.mrb[0].mxu0
    %v1168 = vadd.f32 0.0, %v1167
    %v1169 = vpop.f32.mrb[0].mxu0
    %1170 = vdwg.mxu0
    %v1171 = vadd.f32 %v994, %v1109
    %v1172 = vadd.f32 %v995, %v1112
    %v1173 = vadd.f32 %v996, %v1117
    %v1174 = vadd.f32 %v997, %v1120
    %v1175 = vadd.f32 %v998, %v1125
    %v1176 = vadd.f32 %v999, %v1128
    %v1177 = vadd.f32 %v1000, %v1133
    %v1178 = vadd.f32 %v1001, %v1136
    %v1179 = vadd.f32 %v1002, %v1141
    %v1180 = vadd.f32 %v1003, %v1144
    %v1181 = vadd.f32 %v1004, %v1149
    %v1182 = vadd.f32 %v1005, %v1152
    %v1183 = vadd.f32 %v1006, %v1157
    %v1184 = vadd.f32 %v1007, %v1160
    %v1185 = vadd.f32 %v1008, %v1165
    %v1186 = vadd.f32 %v1009, %v1168
    %1187 = vst [vmem:[#allocation2] sm:$0xff] %v1171
    %1188 = vst [vmem:[#allocation2 + $0x8] sm:$0xff] %v1172
    %1189 = vst [vmem:[#allocation2 + $0x10] sm:$0xff] %v1173
    %1190 = vst [vmem:[#allocation2 + $0x18] sm:$0xff] %v1174
    %1191 = vst [vmem:[#allocation2 + $0x20] sm:$0xff] %v1175
    %1192 = vst [vmem:[#allocation2 + $0x28] sm:$0xff] %v1176
    %1193 = vst [vmem:[#allocation2 + $0x30] sm:$0xff] %v1177
    %1194 = vst [vmem:[#allocation2 + $0x38] sm:$0xff] %v1178
    %1195 = vst [vmem:[#allocation2 + $0x40] sm:$0xff] %v1179
    %1196 = vst [vmem:[#allocation2 + $0x48] sm:$0xff] %v1180
    %1197 = vst [vmem:[#allocation2 + $0x50] sm:$0xff] %v1181
    %1198 = vst [vmem:[#allocation2 + $0x58] sm:$0xff] %v1182
    %1199 = vst [vmem:[#allocation2 + $0x60] sm:$0xff] %v1183
    %1200 = vst [vmem:[#allocation2 + $0x68] sm:$0xff] %v1184
    %1201 = vst [vmem:[#allocation2 + $0x70] sm:$0xff] %v1185
    %1202 = vst [vmem:[#allocation2 + $0x78] sm:$0xff] %v1186
    %v1203 = vld [vmem:[#allocation2] sm:$0xff]
    %v1204 = vld [vmem:[#allocation2 + $0x8] sm:$0xff]
    %v1205 = vld [vmem:[#allocation2 + $0x10] sm:$0xff]
    %v1206 = vld [vmem:[#allocation2 + $0x18] sm:$0xff]
    %v1207 = vld [vmem:[#allocation2 + $0x20] sm:$0xff]
    %v1208 = vld [vmem:[#allocation2 + $0x28] sm:$0xff]
    %v1209 = vld [vmem:[#allocation2 + $0x30] sm:$0xff]
    %v1210 = vld [vmem:[#allocation2 + $0x38] sm:$0xff]
    %v1211 = vld [vmem:[#allocation2 + $0x40] sm:$0xff]
    %v1212 = vld [vmem:[#allocation2 + $0x48] sm:$0xff]
    %v1213 = vld [vmem:[#allocation2 + $0x50] sm:$0xff]
    %v1214 = vld [vmem:[#allocation2 + $0x58] sm:$0xff]
    %v1215 = vld [vmem:[#allocation2 + $0x60] sm:$0xff]
    %v1216 = vld [vmem:[#allocation2 + $0x68] sm:$0xff]
    %v1217 = vld [vmem:[#allocation2 + $0x70] sm:$0xff]
    %v1218 = vld [vmem:[#allocation2 + $0x78] sm:$0xff]
    %v1219 = vld [vmem:[%s4] sm:$0x1]
    %v1221 = vlaneseq
    %v1222 = vshrl.u32 %v1221, 7
    %v1223 = vsub.s32 0, %v1222
    %v1224 = vrot.slane %v1219, %v1223
    %v1226 = vadd.f32 %v1203, %v1224
    %v1227 = vadd.f32 %v1204, %v1224
    %v1228 = vadd.f32 %v1205, %v1224
    %v1229 = vadd.f32 %v1206, %v1224
    %v1230 = vadd.f32 %v1207, %v1224
    %v1231 = vadd.f32 %v1208, %v1224
    %v1232 = vadd.f32 %v1209, %v1224
    %v1233 = vadd.f32 %v1210, %v1224
    %v1234 = vadd.f32 %v1211, %v1224
    %v1235 = vadd.f32 %v1212, %v1224
    %v1236 = vadd.f32 %v1213, %v1224
    %v1237 = vadd.f32 %v1214, %v1224
    %v1238 = vadd.f32 %v1215, %v1224
    %v1239 = vadd.f32 %v1216, %v1224
    %v1240 = vadd.f32 %v1217, %v1224
    %v1241 = vadd.f32 %v1218, %v1224
    %1242 = vst [vmem:[#allocation9] sm:$0xff] %v1226
    %1243 = vst [vmem:[#allocation9 + $0x8] sm:$0xff] %v1227
    %1244 = vst [vmem:[#allocation9 + $0x10] sm:$0xff] %v1228
    %1245 = vst [vmem:[#allocation9 + $0x18] sm:$0xff] %v1229
    %1246 = vst [vmem:[#allocation9 + $0x20] sm:$0xff] %v1230
    %1247 = vst [vmem:[#allocation9 + $0x28] sm:$0xff] %v1231
    %1248 = vst [vmem:[#allocation9 + $0x30] sm:$0xff] %v1232
    %1249 = vst [vmem:[#allocation9 + $0x38] sm:$0xff] %v1233
    %1250 = vst [vmem:[#allocation9 + $0x40] sm:$0xff] %v1234
    %1251 = vst [vmem:[#allocation9 + $0x48] sm:$0xff] %v1235
    %1252 = vst [vmem:[#allocation9 + $0x50] sm:$0xff] %v1236
    %1253 = vst [vmem:[#allocation9 + $0x58] sm:$0xff] %v1237
    %1254 = vst [vmem:[#allocation9 + $0x60] sm:$0xff] %v1238
    %1255 = vst [vmem:[#allocation9 + $0x68] sm:$0xff] %v1239
    %1256 = vst [vmem:[#allocation9 + $0x70] sm:$0xff] %v1240
    %1257 = vst [vmem:[#allocation9 + $0x78] sm:$0xff] %v1241
    // Predicated region
    $region34: #{tpu_custom_call.1} parent=1 // pred_check
      _
    $region35: #{tpu_custom_call.1} parent=1 // pred_check_branch
      %1259 = sbr.rel (0) target = $region37
    $region36: #{tpu_custom_call.1} parent=1 // pred_region
      %s1261 = ssub.s32 2048, 2048
      %1262 = vsyncadd [#allocation5], %s1261
      %s1263 = sshll.u32 [#allocation9], 4
      %s1264 = int_to_ptr.vmem [resolvable:$true] %s1263
      %1269 = dma.vmem_to_hbm [thread:$0]  %s1264, 2048, %s5, [#allocation5], 128, 128, 8
    $region37: #{tpu_custom_call.1} parent=1 // pred_fallthru
      _
    // Predicated region
    $region38: #{tpu_custom_call.1} parent=1 // pred_check
      _
    $region39: #{tpu_custom_call.1} parent=1 // pred_check_branch
      %1271 = sbr.rel (0) target = $region41
    $region40: #{tpu_custom_call.1} parent=1 // pred_region
      %1272 = dma.done [#allocation5], 2048
    $region41: #{tpu_custom_call.1} parent=1 // pred_fallthru
      _
    %1273 = vsyncpa [#allocation4], 1
    %1274 = vsyncpa [#allocation7], 1
    %1275 = vsyncpa [#allocation5], 1

</llo_original>
